<compile_context>
chip_gen: v7x
topology: tpu7x:2x2x1
jax: 0.10.0
libtpu: 0.0.40
codegen_flags: <defaults>
</compile_context>

<pallas_src>
import jax
import jax.numpy as jnp
from jax.experimental import pallas as pl
from jax.experimental.pallas import tpu as pltpu


def _round_up(x, m):
    return (x + m - 1) // m * m


def _sublane_pack(dtype):
    """Native sublane packing: 8 (f32), 16 (bf16), 32 (int8/fp8)."""
    return max(8, 32 // jnp.dtype(dtype).itemsize)


def _pick_tile(dim, preferred, granule=128):
    """Largest tile <= preferred that is a multiple of `granule` and divides
    round_up(dim, granule) exactly -> no partial blocks along this axis and
    no per-call padding when `dim` is already a granule multiple (the usual
    case for d_model / vocab)."""
    dim_pad = _round_up(dim, granule)
    t = max(granule, min((preferred // granule) * granule, dim_pad))
    while dim_pad % t != 0:
        t -= granule
    return t, dim_pad


def _make_generator_kernel(compute_dtype, use_acc_scratch, weight_transposed):
    """Builds the tiled-matmul kernel body.

    x tile: (tm, tk).  Weight tile: (tn, tk) in PyTorch [vocab, d_model]
    layout (contract last dims) or (tk, tn) if pre-transposed.  Bias (1, tn).
    """
    # NOTE: the [N, K]-layout contraction maps to the MXU's native transposed
    # RHS path; verify with pl.lower_as_mlir if per-tile relayouts ever show
    # up — or pass weight_transposed=True with a once-at-load transposed W.
    dnums = (((1,), (0,)), ((), ())) if weight_transposed else (((1,), (1,)), ((), ()))

    def _tile_dot(x_ref, w_ref):
        a = x_ref[...]
        w = w_ref[...]
        if compute_dtype is not None:
            a = a.astype(compute_dtype)
            w = w.astype(compute_dtype)
        return jax.lax.dot_general(
            a, w, dimension_numbers=dnums, preferred_element_type=jnp.float32)

    if use_acc_scratch:
        def kernel(x_ref, w_ref, b_ref, o_ref, acc_ref):
            k = pl.program_id(2)

            @pl.when(k == 0)
            def _():
                acc_ref[...] = jnp.zeros_like(acc_ref)

            acc_ref[...] += _tile_dot(x_ref, w_ref)

            @pl.when(k == pl.num_programs(2) - 1)
            def _():
                out = acc_ref[...] + b_ref[...].astype(jnp.float32)
                o_ref[...] = out.astype(o_ref.dtype)
    else:
        # f32 output: the output block is resident across the K axis, so we
        # accumulate straight into it (saves tm*tn*4 B of VMEM scratch).
        def kernel(x_ref, w_ref, b_ref, o_ref):
            k = pl.program_id(2)

            @pl.when(k == 0)
            def _():
                o_ref[...] = jnp.zeros_like(o_ref)

            o_ref[...] += _tile_dot(x_ref, w_ref)

            @pl.when(k == pl.num_programs(2) - 1)
            def _():
                o_ref[...] += b_ref[...].astype(o_ref.dtype)

    return kernel


def generator_forward(x, weight, bias, *, tm=512, tn=None, tk=512,
                      compute_dtype=None, weight_transposed=False,
                      weight_buffers=2):
    """Equivalent of nn.Linear(d_model, vocab): y = x @ W^T + b.

    x:      [..., d_model]
    weight: [vocab, d_model]  (PyTorch layout) or [d_model, vocab] if
            weight_transposed=True (transpose once at parameter-load time).
    bias:   [vocab]
    compute_dtype: optional narrower MXU dtype (e.g. jnp.bfloat16); the
            accumulation stays f32.
    weight_buffers: >2 enables deeper pipelining on the weight stream
            (useful when weight DMA is exposed at small M / decode).
    """
    d_model = x.shape[-1]
    if weight_transposed:
        assert weight.shape[0] == d_model
        vocab = weight.shape[1]
    else:
        assert weight.shape[1] == d_model
        vocab = weight.shape[0]

    lead_shape = x.shape[:-1]
    m = 1
    for s in lead_shape:
        m *= s
    x2d = x.reshape(m, d_model)

    out_dtype = x.dtype
    cdt = compute_dtype

    # Dtype-aware sublane rounding for the M (row) dimension.
    m_granule = _sublane_pack(x.dtype)
    if cdt is not None:
        m_granule = max(m_granule, _sublane_pack(cdt))

    if tn is None:
        # Wider vocab tiles for sub-32-bit compute; cap at 1024 for f32 so the
        # f32 output/accumulator tiles stay VMEM-friendly on v7x (64 MiB).
        eff = cdt if cdt is not None else x.dtype
        tn = 2048 if jnp.dtype(eff).itemsize < 4 else 1024

    # M: pad cheaply up to tm (activation padding is tiny vs. weight traffic).
    tm = min(tm, _round_up(m, m_granule))
    tm = max(m_granule, (tm // m_granule) * m_granule)
    m_pad = _round_up(m, tm)

    # V / K: exact-divisor tiles so the (large) weight is not padded per call.
    tn, v_pad = _pick_tile(vocab, tn, 128)
    tk, d_pad = _pick_tile(d_model, tk, 128)

    # Give both v7x TensorCores work on the parallel axes when only one
    # (i, j) block would otherwise exist (no-op on 1-TC chips).
    if (m_pad // tm) * (v_pad // tn) < 2 and tn % 256 == 0:
        tn //= 2

    # Pad only when a dim is not already a tile multiple (never the case for
    # the usual 128-multiple d_model / vocab, so no extra weight HBM pass).
    if (m_pad, d_pad) != (m, d_model):
        x2d = jnp.pad(x2d, ((0, m_pad - m), (0, d_pad - d_model)))
    w = weight
    w_pad_shape = (d_pad, v_pad) if weight_transposed else (v_pad, d_pad)
    if w.shape != w_pad_shape:
        w = jnp.pad(w, ((0, w_pad_shape[0] - w.shape[0]),
                        (0, w_pad_shape[1] - w.shape[1])))
    b2d = bias.reshape(1, vocab)
    if v_pad != vocab:
        b2d = jnp.pad(b2d, ((0, 0), (0, v_pad - vocab)))

    grid = (m_pad // tm, v_pad // tn, d_pad // tk)

    use_acc_scratch = jnp.dtype(out_dtype) != jnp.dtype(jnp.float32)
    kernel = _make_generator_kernel(cdt, use_acc_scratch, weight_transposed)

    w_block = (tk, tn) if weight_transposed else (tn, tk)
    w_imap = (lambda i, j, k: (k, j)) if weight_transposed else (lambda i, j, k: (j, k))
    if weight_buffers > 2:
        w_spec = pl.BlockSpec(w_block, w_imap,
                              pipeline_mode=pl.Buffered(weight_buffers))
    else:
        w_spec = pl.BlockSpec(w_block, w_imap)

    scratch_shapes = [pltpu.VMEM((tm, tn), jnp.float32)] if use_acc_scratch else []

    # Explicit VMEM budget for the chosen tiles (double-buffered x / W / bias /
    # out + optional f32 accumulator), with headroom; covers the 16 MiB v5e
    # default-scoped limit and stays under the v7x 64 MiB physical ceiling.
    xi = jnp.dtype(x.dtype).itemsize
    wi = jnp.dtype(weight.dtype).itemsize
    oi = jnp.dtype(out_dtype).itemsize
    vmem_needed = (2 * tm * tk * xi
                   + max(2, weight_buffers) * tn * tk * wi
                   + 2 * tn * 4
                   + 2 * tm * tn * oi
                   + (tm * tn * 4 if use_acc_scratch else 0))
    vmem_limit = min(max(int(vmem_needed * 1.5), 32 * 1024 * 1024),
                     100 * 1024 * 1024)

    # Realistic HBM traffic: W re-read per i-block, x re-read per j-block.
    cost = pl.CostEstimate(
        flops=2 * m_pad * d_pad * v_pad,
        transcendentals=0,
        bytes_accessed=((m_pad // tm) * v_pad * d_pad * wi
                        + (v_pad // tn) * m_pad * d_pad * xi
                        + m_pad * v_pad * oi),
    )

    out = pl.pallas_call(
        kernel,
        out_shape=jax.ShapeDtypeStruct((m_pad, v_pad), out_dtype),
        grid_spec=pltpu.PrefetchScalarGridSpec(
            num_scalar_prefetch=0,
            grid=grid,
            in_specs=[
                pl.BlockSpec((tm, tk), lambda i, j, k: (i, k)),   # activations
                w_spec,                                           # weight
                pl.BlockSpec((1, tn), lambda i, j, k: (0, j)),    # bias
            ],
            out_specs=pl.BlockSpec((tm, tn), lambda i, j, k: (i, j)),
            scratch_shapes=scratch_shapes,
        ),
        compiler_params=pltpu.CompilerParams(
            dimension_semantics=("parallel", "parallel", "arbitrary"),
            vmem_limit_bytes=vmem_limit,
        ),
        cost_estimate=cost,
    )(x2d, w, b2d)

    # TODO(synk): for an int8 (v5e/v6e) or fp8 (v7x) weight path, quantize W
    # once offline and dequantize per tile before the dot.

    out = out[:m, :vocab]
    return out.reshape(*lead_shape, vocab)


if __name__ == "__main__":
    # Small shapes consistent with the module: batch=2, seq=8, d_model=32, vocab=16
    batch, seq, d_model, vocab = 2, 8, 32, 16

    key = jax.random.PRNGKey(0)
    kx, kw, kb = jax.random.split(key, 3)

    x = jax.random.normal(kx, (batch, seq, d_model), dtype=jnp.float32)
    # PyTorch nn.Linear parameter shapes: W [vocab, d_model], b [vocab]
    weight = jax.random.normal(kw, (vocab, d_model), dtype=jnp.float32) * 0.1
    bias = jax.random.normal(kb, (vocab,), dtype=jnp.float32) * 0.1

    y_ref = x @ weight.T + bias

    # Path A: PyTorch [vocab, d_model] weight layout, native f32 compute.
    y = jax.block_until_ready(generator_forward(x, weight, bias))
    assert y.shape == (batch, seq, vocab)
    assert jnp.allclose(y, y_ref, atol=1e-5, rtol=1e-5)

    # Path B: pre-transposed [d_model, vocab] weight + bf16 MXU compute
    # (f32 accumulation) — the bandwidth/throughput-oriented configuration.
    y_bf16 = jax.block_until_ready(
        generator_forward(x, weight.T, bias,
                          compute_dtype=jnp.bfloat16, weight_transposed=True))
    assert y_bf16.shape == (batch, seq, vocab)
    assert jnp.allclose(y_bf16, y_ref, atol=5e-2, rtol=5e-2)

    print("KERNEL_OK")
</pallas_src>

<mosaic_0001>
module attributes {stable_mosaic.version = 11 : i64} {
  func.func @kernel(%arg0: i32, %arg1: i32, %arg2: i32, %arg3: memref<16x128xf32, #tpu.memory_space<vmem>>, %arg4: memref<128x128xf32, #tpu.memory_space<vmem>>, %arg5: memref<1x128xf32, #tpu.memory_space<vmem>>, %arg6: memref<16x128xf32, #tpu.memory_space<vmem>>) attributes {dimension_semantics = [#tpu.dimension_semantics<parallel>, #tpu.dimension_semantics<parallel>, #tpu.dimension_semantics<arbitrary>], iteration_bounds = array<i64: 1, 1, 1>, scalar_prefetch = 0 : i64, scratch_operands = 0 : i64, tpu.core_type = #tpu.core_type<tc>, window_params = [{transform_indices = @transform_0, window_bounds = array<i64: 16, 128>}, {transform_indices = @transform_1, window_bounds = array<i64: 128, 128>}, {transform_indices = @transform_2, window_bounds = array<i64: 1, 128>}, {transform_indices = @transform_3, window_bounds = array<i64: 16, 128>}]} {
    %c0_i32 = arith.constant 0 : i32
    %0 = arith.cmpi eq, %arg2, %c0_i32 : i32
    %1 = arith.extui %0 : i1 to i32
    %c0_i32_0 = arith.constant 0 : i32
    %2 = arith.cmpi ne, %1, %c0_i32_0 : i32
    scf.if %2 {
      %cst_10 = arith.constant 0.000000e+00 : f32
      %12 = vector.broadcast %cst_10 : f32 to vector<16x128xf32>
      %c0_11 = arith.constant 0 : index
      %c0_12 = arith.constant 0 : index
      %13 = vector.load %arg6[%c0_11, %c0_12] : memref<16x128xf32, #tpu.memory_space<vmem>>, vector<16x128xf32>
      tpu.vector_store %arg6[%c0_11, %c0_12], %12 {strides = array<i32>} : memref<16x128xf32, #tpu.memory_space<vmem>>, vector<16x128xf32>,
    } else {
    }
    %c0 = arith.constant 0 : index
    %c0_1 = arith.constant 0 : index
    %3 = vector.load %arg6[%c0, %c0_1] : memref<16x128xf32, #tpu.memory_space<vmem>>, vector<16x128xf32>
    %c0_2 = arith.constant 0 : index
    %c0_3 = arith.constant 0 : index
    %4 = vector.load %arg3[%c0_2, %c0_3] : memref<16x128xf32, #tpu.memory_space<vmem>>, vector<16x128xf32>
    %c0_4 = arith.constant 0 : index
    %c0_5 = arith.constant 0 : index
    %5 = vector.load %arg4[%c0_4, %c0_5] : memref<128x128xf32, #tpu.memory_space<vmem>>, vector<128x128xf32>
    %cst = arith.constant dense<0.000000e+00> : vector<16x128xf32>
    %6 = tpu.matmul %4, %5, %cst {dimension_numbers = #tpu.dot_dimension_numbers<[1], [1], [0], [0], [0, 0, 1, 0], [], []>} : vector<16x128xf32>, vector<128x128xf32>, vector<16x128xf32> -> vector<16x128xf32>
    %7 = arith.addf %3, %6 : vector<16x128xf32>
    %c0_6 = arith.constant 0 : index
    %c0_7 = arith.constant 0 : index
    %8 = vector.load %arg6[%c0_6, %c0_7] : memref<16x128xf32, #tpu.memory_space<vmem>>, vector<16x128xf32>
    tpu.vector_store %arg6[%c0_6, %c0_7], %7 {strides = array<i32>} : memref<16x128xf32, #tpu.memory_space<vmem>>, vector<16x128xf32>,
    %c0_i32_8 = arith.constant 0 : i32
    %9 = arith.cmpi eq, %arg2, %c0_i32_8 : i32
    %10 = arith.extui %9 : i1 to i32
    %c0_i32_9 = arith.constant 0 : i32
    %11 = arith.cmpi ne, %10, %c0_i32_9 : i32
    scf.if %11 {
      %c0_10 = arith.constant 0 : index
      %c0_11 = arith.constant 0 : index
      %12 = vector.load %arg6[%c0_10, %c0_11] : memref<16x128xf32, #tpu.memory_space<vmem>>, vector<16x128xf32>
      %c0_12 = arith.constant 0 : index
      %c0_13 = arith.constant 0 : index
      %13 = vector.load %arg5[%c0_12, %c0_13] : memref<1x128xf32, #tpu.memory_space<vmem>>, vector<1x128xf32>
      %14 = vector.broadcast %13 : vector<1x128xf32> to vector<16x128xf32>
      %15 = arith.addf %12, %14 : vector<16x128xf32>
      %c0_14 = arith.constant 0 : index
      %c0_15 = arith.constant 0 : index
      %16 = vector.load %arg6[%c0_14, %c0_15] : memref<16x128xf32, #tpu.memory_space<vmem>>, vector<16x128xf32>
      tpu.vector_store %arg6[%c0_14, %c0_15], %15 {strides = array<i32>} : memref<16x128xf32, #tpu.memory_space<vmem>>, vector<16x128xf32>,
    } else {
    }
    return
  }
  func.func @transform_0(%arg0: i32, %arg1: i32, %arg2: i32) -> (i32, i32) {
    %c0_i32 = arith.constant 0 : i32
    return %arg0, %arg2 : i32, i32
  }
  func.func @transform_1(%arg0: i32, %arg1: i32, %arg2: i32) -> (i32, i32) {
    %c0_i32 = arith.constant 0 : i32
    return %arg1, %arg2 : i32, i32
  }
  func.func @transform_2(%arg0: i32, %arg1: i32, %arg2: i32) -> (i32, i32) {
    %c0_i32 = arith.constant 0 : i32
    %c0_i32_0 = arith.constant 0 : i32
    return %c0_i32, %arg1 : i32, i32
  }
  func.func @transform_3(%arg0: i32, %arg1: i32, %arg2: i32) -> (i32, i32) {
    %c0_i32 = arith.constant 0 : i32
    return %arg0, %arg1 : i32, i32
  }
}

</mosaic_0001>

<llo_original>
// kernel: tpu_custom_call.1
$region0: #{tpu_custom_call.1}
  #allocation0 [shape = 'u32[]', space=smem, size = 0x4, offset = 0x4, fixed_abs, tag = 'smem constant byte address 0x4 - core index']
  #allocation1 [shape = 'u32[144,128]{1,0:T(1,128)}', space=vmem, size = 0x12000, scoped, tag = 'internal scratch']
  %s0 = inlined_call_operand.hbm [shape: f32[16,128], index: 0, kind: input, shape index: {}]
  %s1 = inlined_call_operand.hbm [shape: f32[128,128], index: 1, kind: input, shape index: {}]
  %s2 = inlined_call_operand.vmem [shape: f32[1,128], index: 2, kind: input, shape index: {}]
  %s3 = inlined_call_operand.hbm [shape: f32[16,128], index: 3, kind: output, shape index: {}]
  %s4 = sld [smem:[#allocation0]]
  $region38: #{tpu_custom_call.1} parent=0
    _
  %s6 = ssub.s32 1, %s4
  %s7 = scalar_select 0, %s6, %s4
  $region1: #{tpu_custom_call.1} parent=0
    #allocation2 [shape = 'u8[8192]{0}', space=vmem, size = 0x2000, scoped, tag = 'input window, operand 0, single buffered']
    #allocation3 [shape = 's32[1]{0}', space=sflag, size = 0x4, scoped, tag = 'scoped memory for tpu_custom_call.1']
    #allocation4 [shape = 's32[1]{0}', space=sflag, size = 0x4, scoped, tag = 'scoped memory for tpu_custom_call.1']
    #allocation5 [shape = 'u8[65536]{0}', space=vmem, size = 0x10000, scoped, tag = 'input window, operand 1, single buffered']
    #allocation6 [shape = 's32[1]{0}', space=sflag, size = 0x4, scoped, tag = 'scoped memory for tpu_custom_call.1']
    #allocation7 [shape = 'u8[8192]{0}', space=vmem, size = 0x2000, scoped, tag = 'output window, operand 0, single buffered']
    %8 = vsyncpa [#allocation3], 0
    %9 = vsyncpa [#allocation6], 0
    %10 = vsyncpa [#allocation4], 0
    // Predicated region
    $region2: #{tpu_custom_call.1} parent=1 // pred_check
      _
    $region3: #{tpu_custom_call.1} parent=1 // pred_check_branch
      %12 = sbr.rel (0) target = $region5
    $region4: #{tpu_custom_call.1} parent=1 // pred_region
      %s14 = ssub.s32 256, 256
      %15 = vsyncadd [#allocation3], %s14
      %s16 = sshll.u32 [#allocation2], 4
      %s17 = int_to_ptr.vmem [resolvable:$true] %s16
      %22 = dma.hbm_to_vmem [thread:$0]  %s0, 256, %s17, [#allocation3], 128, 128, 8
    $region5: #{tpu_custom_call.1} parent=1 // pred_fallthru
      _
    // Predicated region
    $region6: #{tpu_custom_call.1} parent=1 // pred_check
      _
    $region7: #{tpu_custom_call.1} parent=1 // pred_check_branch
      %24 = sbr.rel (0) target = $region9
    $region8: #{tpu_custom_call.1} parent=1 // pred_region
      %s26 = ssub.s32 2048, 2048
      %27 = vsyncadd [#allocation6], %s26
      %s28 = sshll.u32 [#allocation5], 4
      %s29 = int_to_ptr.vmem [resolvable:$true] %s28
      %34 = dma.hbm_to_vmem [thread:$0]  %s1, 2048, %s29, [#allocation6], 128, 128, 8
    $region9: #{tpu_custom_call.1} parent=1 // pred_fallthru
      _
    // Predicated region
    $region10: #{tpu_custom_call.1} parent=1 // pred_check
      _
    $region11: #{tpu_custom_call.1} parent=1 // pred_check_branch
      %36 = sbr.rel (0) target = $region13
    $region12: #{tpu_custom_call.1} parent=1 // pred_region
      _
    $region13: #{tpu_custom_call.1} parent=1 // pred_fallthru
      _
    // Predicated region
    $region14: #{tpu_custom_call.1} parent=1 // pred_check
      _
    $region15: #{tpu_custom_call.1} parent=1 // pred_check_branch
      %38 = sbr.rel (0) target = $region17
    $region16: #{tpu_custom_call.1} parent=1 // pred_region
      %39 = dma.done [#allocation3], 256
    $region17: #{tpu_custom_call.1} parent=1 // pred_fallthru
      _
    // Predicated region
    $region18: #{tpu_custom_call.1} parent=1 // pred_check
      _
    $region19: #{tpu_custom_call.1} parent=1 // pred_check_branch
      %41 = sbr.rel (0) target = $region21
    $region20: #{tpu_custom_call.1} parent=1 // pred_region
      %42 = dma.done [#allocation6], 2048
    $region21: #{tpu_custom_call.1} parent=1 // pred_fallthru
      _
    %p43 = scmp.eq.s32.totalorder 0, 0
    // Predicated region
    $region22: #{tpu_custom_call.1} parent=1 // pred_check
      %p44 = pneg %p43
    $region23: #{tpu_custom_call.1} parent=1 // pred_check_branch
      %46 = sbr.rel (%p44) target = $region25
    $region24: #{tpu_custom_call.1} parent=1 // pred_region
      %47 = vst [vmem:[#allocation7] sm:$0xff] 0.0
      %48 = vst [vmem:[#allocation7 + $0x8] sm:$0xff] 0.0
    $region25: #{tpu_custom_call.1} parent=1 // pred_fallthru
      _
    %v49 = vld [vmem:[#allocation7] sm:$0xff]
    %v50 = vld [vmem:[#allocation7 + $0x8] sm:$0xff]
    %v51 = vld [vmem:[#allocation2] sm:$0xff]
    %v52 = vld [vmem:[#allocation2 + $0x8] sm:$0xff]
    %v53 = vld [vmem:[#allocation5] sm:$0xff]
    %v54 = vld [vmem:[#allocation5 + $0x8] sm:$0xff]
    %v55 = vld [vmem:[#allocation5 + $0x10] sm:$0xff]
    %v56 = vld [vmem:[#allocation5 + $0x18] sm:$0xff]
    %v57 = vld [vmem:[#allocation5 + $0x20] sm:$0xff]
    %v58 = vld [vmem:[#allocation5 + $0x28] sm:$0xff]
    %v59 = vld [vmem:[#allocation5 + $0x30] sm:$0xff]
    %v60 = vld [vmem:[#allocation5 + $0x38] sm:$0xff]
    %v61 = vld [vmem:[#allocation5 + $0x40] sm:$0xff]
    %v62 = vld [vmem:[#allocation5 + $0x48] sm:$0xff]
    %v63 = vld [vmem:[#allocation5 + $0x50] sm:$0xff]
    %v64 = vld [vmem:[#allocation5 + $0x58] sm:$0xff]
    %v65 = vld [vmem:[#allocation5 + $0x60] sm:$0xff]
    %v66 = vld [vmem:[#allocation5 + $0x68] sm:$0xff]
    %v67 = vld [vmem:[#allocation5 + $0x70] sm:$0xff]
    %v68 = vld [vmem:[#allocation5 + $0x78] sm:$0xff]
    %69 = vmatprep.subr.mxu0 0.0
    %70 = vmatpush1.xpose.msra.mxu0 %v53
    %71 = vmatprep.subr.mxu0 0.0
    %72 = vmatpush1.xpose.msra.mxu0 %v54
    %73 = vmatprep.subr.mxu0 0.0
    %74 = vmatpush1.xpose.msra.mxu0 %v55
    %75 = vmatprep.subr.mxu0 0.0
    %76 = vmatpush1.xpose.msra.mxu0 %v56
    %77 = vmatprep.subr.mxu0 0.0
    %78 = vmatpush1.xpose.msra.mxu0 %v57
    %79 = vmatprep.subr.mxu0 0.0
    %80 = vmatpush1.xpose.msra.mxu0 %v58
    %81 = vmatprep.subr.mxu0 0.0
    %82 = vmatpush1.xpose.msra.mxu0 %v59
    %83 = vmatprep.subr.mxu0 0.0
    %84 = vmatpush1.xpose.msra.mxu0 %v60
    %85 = vmatprep.subr.mxu0 0.0
    %86 = vmatpush1.xpose.msra.mxu0 %v61
    %87 = vmatprep.subr.mxu0 0.0
    %88 = vmatpush1.xpose.msra.mxu0 %v62
    %89 = vmatprep.subr.mxu0 0.0
    %90 = vmatpush1.xpose.msra.mxu0 %v63
    %91 = vmatprep.subr.mxu0 0.0
    %92 = vmatpush1.xpose.msra.mxu0 %v64
    %93 = vmatprep.subr.mxu0 0.0
    %94 = vmatpush1.xpose.msra.mxu0 %v65
    %95 = vmatprep.subr.mxu0 0.0
    %96 = vmatpush1.xpose.msra.mxu0 %v66
    %97 = vmatprep.subr.mxu0 0.0
    %98 = vmatpush1.xpose.msra.mxu0 %v67
    %99 = vmatprep.subr.mxu0 0.0
    %100 = vmatpush1.xpose.msra.mxu0 %v68
    %101 = vmatprep.subr.mxu0 0.0
    %102 = vmatpush1.xpose.msra.mxu0 0.0
    %103 = vmatprep.subr.mxu0 0.0
    %104 = vmatpush1.xpose.msra.mxu0 0.0
    %105 = vmatprep.subr.mxu0 0.0
    %106 = vmatpush1.xpose.msra.mxu0 0.0
    %107 = vmatprep.subr.mxu0 0.0
    %108 = vmatpush1.xpose.msra.mxu0 0.0
    %109 = vmatprep.subr.mxu0 0.0
    %110 = vmatpush1.xpose.msra.mxu0 0.0
    %111 = vmatprep.subr.mxu0 0.0
    %112 = vmatpush1.xpose.msra.mxu0 0.0
    %113 = vmatprep.subr.mxu0 0.0
    %114 = vmatpush1.xpose.msra.mxu0 0.0
    %115 = vmatprep.subr.mxu0 0.0
    %116 = vmatpush1.xpose.msra.mxu0 0.0
    %117 = vmatprep.subr.mxu0 0.0
    %118 = vmatpush1.xpose.msra.mxu0 0.0
    %119 = vmatprep.subr.mxu0 0.0
    %120 = vmatpush1.xpose.msra.mxu0 0.0
    %121 = vmatprep.subr.mxu0 0.0
    %122 = vmatpush1.xpose.msra.mxu0 0.0
    %123 = vmatprep.subr.mxu0 0.0
    %124 = vmatpush1.xpose.msra.mxu0 0.0
    %125 = vmatprep.subr.mxu0 0.0
    %126 = vmatpush1.xpose.msra.mxu0 0.0
    %127 = vmatprep.subr.mxu0 0.0
    %128 = vmatpush1.xpose.msra.mxu0 0.0
    %129 = vmatprep.subr.mxu0 0.0
    %130 = vmatpush1.xpose.msra.mxu0 0.0
    %131 = vmatprep.subr.mxu0 0.0
    %132 = vmatpush1.xpose.msra.mxu0 0.0
    %133 = vmatprep.mubr.f32.mxu0 0.0
    %134 = vmatmul.mubr.f32.gmra.mrb[0].mxu0 %v51
    %v135 = vpop.f32.mrb[0].mxu0
    %v136 = vadd.f32 0.0, %v135
    %v137 = vpop.f32.mrb[0].mxu0
    %138 = vmatprep.mubr.f32.mxu0 0.0
    %139 = vmatmul.mubr.f32.gmra.mrb[0].mxu0 %v52
    %v140 = vpop.f32.mrb[0].mxu0
    %v141 = vadd.f32 0.0, %v140
    %v142 = vpop.f32.mrb[0].mxu0
    %143 = vdwg.mxu0
    %v144 = vadd.f32 %v49, %v136
    %v145 = vadd.f32 %v50, %v141
    %146 = vst [vmem:[#allocation7] sm:$0xff] %v144
    %147 = vst [vmem:[#allocation7 + $0x8] sm:$0xff] %v145
    // Predicated region
    $region26: #{tpu_custom_call.1} parent=1 // pred_check
      %p148 = pneg %p43
    $region27: #{tpu_custom_call.1} parent=1 // pred_check_branch
      %150 = sbr.rel (%p148) target = $region29
    $region28: #{tpu_custom_call.1} parent=1 // pred_region
      %v151 = vld [vmem:[#allocation7] sm:$0xff]
      %v152 = vld [vmem:[#allocation7 + $0x8] sm:$0xff]
      %v153 = vld [vmem:[%s2] sm:$0x1]
      %v155 = vlaneseq
      %v156 = vshrl.u32 %v155, 7
      %v157 = vsub.s32 0, %v156
      %v158 = vrot.slane %v153, %v157
      %v160 = vadd.f32 %v151, %v158
      %v161 = vadd.f32 %v152, %v158
      %162 = vst [vmem:[#allocation7] sm:$0xff] %v160
      %163 = vst [vmem:[#allocation7 + $0x8] sm:$0xff] %v161
    $region29: #{tpu_custom_call.1} parent=1 // pred_fallthru
      _
    // Predicated region
    $region30: #{tpu_custom_call.1} parent=1 // pred_check
      _
    $region31: #{tpu_custom_call.1} parent=1 // pred_check_branch
      %165 = sbr.rel (0) target = $region33
    $region32: #{tpu_custom_call.1} parent=1 // pred_region
      %s167 = ssub.s32 256, 256
      %168 = vsyncadd [#allocation4], %s167
      %s169 = sshll.u32 [#allocation7], 4
      %s170 = int_to_ptr.vmem [resolvable:$true] %s169
      %175 = dma.vmem_to_hbm [thread:$0]  %s170, 256, %s3, [#allocation4], 128, 128, 8
    $region33: #{tpu_custom_call.1} parent=1 // pred_fallthru
      _
    // Predicated region
    $region34: #{tpu_custom_call.1} parent=1 // pred_check
      _
    $region35: #{tpu_custom_call.1} parent=1 // pred_check_branch
      %177 = sbr.rel (0) target = $region37
    $region36: #{tpu_custom_call.1} parent=1 // pred_region
      %178 = dma.done [#allocation4], 256
    $region37: #{tpu_custom_call.1} parent=1 // pred_fallthru
      _
    %179 = vsyncpa [#allocation3], 1
    %180 = vsyncpa [#allocation6], 1
    %181 = vsyncpa [#allocation4], 1

</llo_original>
